<compile_context>
chip_gen: v5e
topology: v5e:2x2
jax: 0.10.0
libtpu: 0.0.40
codegen_flags: <defaults>
</compile_context>

<pallas_src>
import math
import functools

import jax
import jax.numpy as jnp
from jax import lax
from jax.experimental import pallas as pl
from jax.experimental.pallas import tpu as pltpu


# ----------------------------- Pallas kernel ------------------------------

def _add_norm_kernel(x_ref, y_ref, g_ref, b_ref, o_ref, *, eps):
    """Fused residual-add + LayerNorm over the last (lane) dim.

    x_ref, y_ref, o_ref : (block_rows, D)  activations
    g_ref, b_ref        : (1, D)           LayerNorm affine parameters
    All math in f32 (VPU/EUP-friendly on every TPU generation, incl. v5e).
    """
    # dropout(Y) with p == 0 / eval mode is the identity.
    # TODO(synk): training-mode stochastic dropout mask (pltpu.prng_*) for p > 0.
    s = x_ref[...].astype(jnp.float32) + y_ref[...].astype(jnp.float32)
    mu = jnp.mean(s, axis=-1, keepdims=True)
    c = s - mu
    var = jnp.mean(c * c, axis=-1, keepdims=True)
    normed = c * lax.rsqrt(var + eps)                    # rsqrt -> EUP slot
    out = normed * g_ref[...].astype(jnp.float32) + b_ref[...].astype(jnp.float32)
    o_ref[...] = out.astype(o_ref.dtype)


# ------------------------------- Wrapper -----------------------------------

def _pick_block_rows(rows, d, itemsize):
    """Largest row tile (multiple of 8) whose double-buffered working set
    (x, y, out tiles) stays well inside the default scoped-VMEM window.
    For small problems this returns `rows`, collapsing the grid to one step."""
    budget = 8 * 1024 * 1024                       # conservative vs. scoped default
    bytes_per_row = 3 * 2 * d * max(itemsize, 4)   # 3 arrays x 2 buffers, f32 compute
    max_rows = max(8, (budget // bytes_per_row) // 8 * 8)
    return rows if rows <= max_rows else max_rows


def add_norm(X, Y, gamma, beta, *, eps=1e-5):
    """AddNorm.forward(X, Y) = LayerNorm(dropout(Y) + X), dropout == identity."""
    assert X.shape == Y.shape, "X and Y must have the same shape"
    D = X.shape[-1]
    rows = math.prod(X.shape[:-1])

    # Flatten all leading dims: LayerNorm is per-row over the last dim, so a
    # (rows, D) view with D on the lane axis is the densest layout we can use
    # without changing semantics.
    x2 = X.reshape(rows, D)
    y2 = Y.reshape(rows, D)
    g2 = gamma.reshape(1, D)
    b2 = beta.reshape(1, D)

    block_rows = _pick_block_rows(rows, D, jnp.dtype(X.dtype).itemsize)
    grid = (pl.cdiv(rows, block_rows),)

    row_spec = pl.BlockSpec((block_rows, D), lambda i: (i, 0))
    par_spec = pl.BlockSpec((1, D), lambda i: (0, 0))     # same params every step

    out = pl.pallas_call(
        functools.partial(_add_norm_kernel, eps=eps),
        grid=grid,
        in_specs=[row_spec, row_spec, par_spec, par_spec],
        out_specs=row_spec,
        out_shape=jax.ShapeDtypeStruct((rows, D), X.dtype),
        compiler_params=pltpu.CompilerParams(
            dimension_semantics=("parallel",)),           # megacore split on v7x
    )(x2, y2, g2, b2)
    return out.reshape(X.shape)


# ------------------------------ Reference -----------------------------------

def _ref_add_norm(X, Y, gamma, beta, eps=1e-5):
    s = X + Y
    mu = s.mean(-1, keepdims=True)
    var = ((s - mu) ** 2).mean(-1, keepdims=True)
    return (s - mu) / jnp.sqrt(var + eps) * gamma + beta


# --------------------------------- main --------------------------------------

if __name__ == "__main__":
    key = jax.random.PRNGKey(0)
    kx, ky, kg, kb, kx2, ky2 = jax.random.split(key, 6)

    # Small shapes consistent with the transformer module: batch=2, seq=8, hidden=32.
    B, T, D = 2, 8, 32
    X = jax.random.normal(kx, (B, T, D), jnp.float32)
    Y = jax.random.normal(ky, (B, T, D), jnp.float32)
    gamma = 1.0 + 0.1 * jax.random.normal(kg, (D,), jnp.float32)
    beta = 0.1 * jax.random.normal(kb, (D,), jnp.float32)

    out = add_norm(X, Y, gamma, beta)
    out = jax.block_until_ready(out)
    ref = _ref_add_norm(X, Y, gamma, beta)
    assert out.shape == X.shape
    assert jnp.allclose(out, ref, atol=2e-5, rtol=2e-5)

    # A second, lane-dense shape to exercise the same kernel path.
    B2, T2, D2 = 4, 300, 128
    X2 = jax.random.normal(kx2, (B2, T2, D2), jnp.float32)
    Y2 = jax.random.normal(ky2, (B2, T2, D2), jnp.float32)
    g2 = jnp.ones((D2,), jnp.float32)
    b2 = jnp.zeros((D2,), jnp.float32)
    out2 = jax.block_until_ready(add_norm(X2, Y2, g2, b2))
    ref2 = _ref_add_norm(X2, Y2, g2, b2)
    assert out2.shape == X2.shape
    assert jnp.allclose(out2, ref2, atol=2e-5, rtol=2e-5)

    print("KERNEL_OK")
</pallas_src>

<mosaic_0001>
module attributes {stable_mosaic.version = 11 : i64} {
  func.func @_add_norm_kernel(%arg0: i32, %arg1: memref<16x32xf32, #tpu.memory_space<vmem>>, %arg2: memref<16x32xf32, #tpu.memory_space<vmem>>, %arg3: memref<1x32xf32, #tpu.memory_space<vmem>>, %arg4: memref<1x32xf32, #tpu.memory_space<vmem>>, %arg5: memref<16x32xf32, #tpu.memory_space<vmem>>) attributes {dimension_semantics = [#tpu.dimension_semantics<parallel>], iteration_bounds = array<i64: 1>, scalar_prefetch = 0 : i64, scratch_operands = 0 : i64, tpu.core_type = #tpu.core_type<tc>, window_params = [{transform_indices = @transform_0, window_bounds = array<i64: 16, 32>}, {transform_indices = @transform_1, window_bounds = array<i64: 16, 32>}, {pipeline_mode = #tpu.pipeline_mode<synchronous>, transform_indices = @transform_2, window_bounds = array<i64: 1, 32>}, {pipeline_mode = #tpu.pipeline_mode<synchronous>, transform_indices = @transform_3, window_bounds = array<i64: 1, 32>}, {transform_indices = @transform_4, window_bounds = array<i64: 16, 32>}]} {
    %c0 = arith.constant 0 : index
    %c0_0 = arith.constant 0 : index
    %0 = vector.load %arg1[%c0, %c0_0] : memref<16x32xf32, #tpu.memory_space<vmem>>, vector<16x32xf32>
    %c0_1 = arith.constant 0 : index
    %c0_2 = arith.constant 0 : index
    %1 = vector.load %arg2[%c0_1, %c0_2] : memref<16x32xf32, #tpu.memory_space<vmem>>, vector<16x32xf32>
    %2 = arith.addf %0, %1 : vector<16x32xf32>
    %cst = arith.constant dense<0.000000e+00> : vector<16xf32>
    %3 = vector.multi_reduction <add>, %2, %cst [1] : vector<16x32xf32> to vector<16xf32>
    %4 = vector.shape_cast %3 : vector<16xf32> to vector<16x1xf32>
    %cst_3 = arith.constant 3.200000e+01 : f32
    %5 = vector.broadcast %cst_3 : f32 to vector<16x1xf32>
    %6 = arith.divf %4, %5 : vector<16x1xf32>
    %7 = vector.broadcast %6 : vector<16x1xf32> to vector<16x32xf32>
    %8 = arith.subf %2, %7 : vector<16x32xf32>
    %9 = arith.mulf %8, %8 : vector<16x32xf32>
    %cst_4 = arith.constant dense<0.000000e+00> : vector<16xf32>
    %10 = vector.multi_reduction <add>, %9, %cst_4 [1] : vector<16x32xf32> to vector<16xf32>
    %11 = vector.shape_cast %10 : vector<16xf32> to vector<16x1xf32>
    %cst_5 = arith.constant 3.200000e+01 : f32
    %12 = vector.broadcast %cst_5 : f32 to vector<16x1xf32>
    %13 = arith.divf %11, %12 : vector<16x1xf32>
    %cst_6 = arith.constant 9.99999974E-6 : f32
    %14 = vector.broadcast %cst_6 : f32 to vector<16x1xf32>
    %15 = arith.addf %13, %14 : vector<16x1xf32>
    %16 = math.rsqrt %15 : vector<16x1xf32>
    %17 = vector.broadcast %16 : vector<16x1xf32> to vector<16x32xf32>
    %18 = arith.mulf %8, %17 : vector<16x32xf32>
    %c0_7 = arith.constant 0 : index
    %c0_8 = arith.constant 0 : index
    %19 = vector.load %arg3[%c0_7, %c0_8] : memref<1x32xf32, #tpu.memory_space<vmem>>, vector<1x32xf32>
    %20 = vector.broadcast %19 : vector<1x32xf32> to vector<16x32xf32>
    %21 = arith.mulf %18, %20 : vector<16x32xf32>
    %c0_9 = arith.constant 0 : index
    %c0_10 = arith.constant 0 : index
    %22 = vector.load %arg4[%c0_9, %c0_10] : memref<1x32xf32, #tpu.memory_space<vmem>>, vector<1x32xf32>
    %23 = vector.broadcast %22 : vector<1x32xf32> to vector<16x32xf32>
    %24 = arith.addf %21, %23 : vector<16x32xf32>
    %c0_11 = arith.constant 0 : index
    %c0_12 = arith.constant 0 : index
    %25 = vector.load %arg5[%c0_11, %c0_12] : memref<16x32xf32, #tpu.memory_space<vmem>>, vector<16x32xf32>
    tpu.vector_store %arg5[%c0_11, %c0_12], %24 {strides = array<i32>} : memref<16x32xf32, #tpu.memory_space<vmem>>, vector<16x32xf32>,
    return
  }
  func.func @transform_0(%arg0: i32) -> (i32, i32) {
    %c0_i32 = arith.constant 0 : i32
    %c0_i32_0 = arith.constant 0 : i32
    return %arg0, %c0_i32 : i32, i32
  }
  func.func @transform_1(%arg0: i32) -> (i32, i32) {
    %c0_i32 = arith.constant 0 : i32
    %c0_i32_0 = arith.constant 0 : i32
    return %arg0, %c0_i32 : i32, i32
  }
  func.func @transform_2(%arg0: i32) -> (i32, i32) {
    %c0_i32 = arith.constant 0 : i32
    %c0_i32_0 = arith.constant 0 : i32
    %c0_i32_1 = arith.constant 0 : i32
    return %c0_i32, %c0_i32_0 : i32, i32
  }
  func.func @transform_3(%arg0: i32) -> (i32, i32) {
    %c0_i32 = arith.constant 0 : i32
    %c0_i32_0 = arith.constant 0 : i32
    %c0_i32_1 = arith.constant 0 : i32
    return %c0_i32, %c0_i32_0 : i32, i32
  }
  func.func @transform_4(%arg0: i32) -> (i32, i32) {
    %c0_i32 = arith.constant 0 : i32
    %c0_i32_0 = arith.constant 0 : i32
    return %arg0, %c0_i32 : i32, i32
  }
}

</mosaic_0001>

<llo_original>
// kernel: tpu_custom_call.1
$region0: #{tpu_custom_call.1}
  #allocation0 [shape = 'u32[]', space=smem, size = 0x4, offset = 0x4, fixed_abs, tag = 'smem constant byte address 0x4 - core index']
  #allocation1 [shape = 'u32[72,128]{1,0:T(1,128)}', space=vmem, size = 0x9000, scoped, tag = 'internal scratch']
  %s0 = inlined_call_operand.hbm [shape: f32[16,32], index: 0, kind: input, shape index: {}]
  %s1 = inlined_call_operand.hbm [shape: f32[16,32], index: 1, kind: input, shape index: {}]
  %s2 = inlined_call_operand.vmem [shape: f32[1,32], index: 2, kind: input, shape index: {}]
  %s3 = inlined_call_operand.vmem [shape: f32[1,32], index: 3, kind: input, shape index: {}]
  %s4 = inlined_call_operand.hbm [shape: f32[16,32], index: 4, kind: output, shape index: {}]
  %s5 = sld [smem:[#allocation0]]
  $region34: #{tpu_custom_call.1} parent=0
    _
  %s7 = ssub.s32 1, %s5
  %s8 = scalar_select 0, %s7, %s5
  $region1: #{tpu_custom_call.1} parent=0
    #allocation2 [shape = 'u8[8192]{0}', space=vmem, size = 0x2000, scoped, tag = 'input window, operand 0, single buffered']
    #allocation3 [shape = 's32[1]{0}', space=sflag, size = 0x4, scoped, tag = 'scoped memory for tpu_custom_call.1']
    #allocation4 [shape = 's32[1]{0}', space=sflag, size = 0x4, scoped, tag = 'scoped memory for tpu_custom_call.1']
    #allocation5 [shape = 'u8[8192]{0}', space=vmem, size = 0x2000, scoped, tag = 'input window, operand 1, single buffered']
    #allocation6 [shape = 's32[1]{0}', space=sflag, size = 0x4, scoped, tag = 'scoped memory for tpu_custom_call.1']
    #allocation7 [shape = 'u8[8192]{0}', space=vmem, size = 0x2000, scoped, tag = 'output window, operand 0, single buffered']
    %9 = vsyncpa [#allocation3], 0
    %10 = vsyncpa [#allocation6], 0
    %11 = vsyncpa [#allocation4], 0
    // Predicated region
    $region2: #{tpu_custom_call.1} parent=1 // pred_check
      _
    $region3: #{tpu_custom_call.1} parent=1 // pred_check_branch
      %13 = sbr.rel (0) target = $region5
    $region4: #{tpu_custom_call.1} parent=1 // pred_region
      %15 = vsyncadd [#allocation3], 0
      %s16 = sshll.u32 %s0, 4
      %s17 = int_to_ptr.hbm [resolvable:$true] %s16
      %s18 = sshll.u32 [#allocation2], 4
      %s19 = int_to_ptr.vmem [resolvable:$true] %s18
      %24 = dma.hbm_to_vmem [thread:$0]  %s17, 256, %s19, [#allocation3], 128, 128, 8
    $region5: #{tpu_custom_call.1} parent=1 // pred_fallthru
      _
    // Predicated region
    $region6: #{tpu_custom_call.1} parent=1 // pred_check
      _
    $region7: #{tpu_custom_call.1} parent=1 // pred_check_branch
      %26 = sbr.rel (0) target = $region9
    $region8: #{tpu_custom_call.1} parent=1 // pred_region
      %28 = vsyncadd [#allocation6], 0
      %s29 = sshll.u32 %s1, 4
      %s30 = int_to_ptr.hbm [resolvable:$true] %s29
      %s31 = sshll.u32 [#allocation5], 4
      %s32 = int_to_ptr.vmem [resolvable:$true] %s31
      %37 = dma.hbm_to_vmem [thread:$0]  %s30, 256, %s32, [#allocation6], 128, 128, 8
    $region9: #{tpu_custom_call.1} parent=1 // pred_fallthru
      _
    // Predicated region
    $region10: #{tpu_custom_call.1} parent=1 // pred_check
      _
    $region11: #{tpu_custom_call.1} parent=1 // pred_check_branch
      %39 = sbr.rel (0) target = $region13
    $region12: #{tpu_custom_call.1} parent=1 // pred_region
      _
    $region13: #{tpu_custom_call.1} parent=1 // pred_fallthru
      _
    // Predicated region
    $region14: #{tpu_custom_call.1} parent=1 // pred_check
      _
    $region15: #{tpu_custom_call.1} parent=1 // pred_check_branch
      %41 = sbr.rel (0) target = $region17
    $region16: #{tpu_custom_call.1} parent=1 // pred_region
      _
    $region17: #{tpu_custom_call.1} parent=1 // pred_fallthru
      _
    // Predicated region
    $region18: #{tpu_custom_call.1} parent=1 // pred_check
      _
    $region19: #{tpu_custom_call.1} parent=1 // pred_check_branch
      %43 = sbr.rel (0) target = $region21
    $region20: #{tpu_custom_call.1} parent=1 // pred_region
      %45 = dma.done [#allocation3], 256
    $region21: #{tpu_custom_call.1} parent=1 // pred_fallthru
      _
    // Predicated region
    $region22: #{tpu_custom_call.1} parent=1 // pred_check
      _
    $region23: #{tpu_custom_call.1} parent=1 // pred_check_branch
      %47 = sbr.rel (0) target = $region25
    $region24: #{tpu_custom_call.1} parent=1 // pred_region
      %49 = dma.done [#allocation6], 256
    $region25: #{tpu_custom_call.1} parent=1 // pred_fallthru
      _
    %v50 = vld [vmem:[#allocation2] sm:$0xff]
    %v51 = vld [vmem:[#allocation2 + $0x8] sm:$0xff]
    %v52 = vld [vmem:[#allocation5] sm:$0xff]
    %v53 = vld [vmem:[#allocation5 + $0x8] sm:$0xff]
    %v54 = vadd.f32 %v50, %v52
    %v55 = vadd.f32 %v51, %v53
    %vm56 = vcmask 261120
    %v57 = vsel %vm56, %v54, 0.0
    %58 = vadd.xlane.f32.xlu0 %v57
    %v59 = vpop.xlane.xlu0 %58
    %v60 = vsel %vm56, %v55, 0.0
    %61 = vadd.xlane.f32.xlu0 %v60
    %v62 = vpop.xlane.xlu0 %61
    %v63 = vrcp.pop 32.0
    %v64 = vmul.f32 32.0, %v63
    %v65 = vsub.f32 1.0, %v64
    %v66 = vmul.f32 %v63, %v65
    %v67 = vadd.f32 %v63, %v66
    %vm68 = vweird.f32 %v63
    %v69 = vsel %vm68, %v63, %v67
    %v70 = vmul.f32 %v59, %v69
    %v71 = vmul.f32 %v62, %v69
    %v72 = vsub.f32 %v54, %v70
    %v73 = vsub.f32 %v55, %v71
    %v74 = vmul.f32 %v72, %v72
    %v75 = vmul.f32 %v73, %v73
    %v76 = vsel %vm56, %v74, 0.0
    %77 = vadd.xlane.f32.xlu0 %v76
    %v78 = vpop.xlane.xlu0 %77
    %v79 = vsel %vm56, %v75, 0.0
    %80 = vadd.xlane.f32.xlu0 %v79
    %v81 = vpop.xlane.xlu0 %80
    %v82 = vmul.f32 %v78, %v69
    %v83 = vmul.f32 %v81, %v69
    %v84 = vadd.f32 %v82, 1e-05
    %v85 = vadd.f32 %v83, 1e-05
    %v86 = vrsqrt.pop %v84
    %v87 = vmul.f32 %v86, %v84
    %v88 = vmul.f32 %v87, %v86
    %v89 = vmul.f32 0.5, %v88
    %v90 = vsub.f32 1.5, %v89
    %v91 = vmul.f32 %v86, %v90
    %vm92 = vweird.f32 %v84
    %vm93 = vweird.f32 %v86
    %vm94 = vmor %vm92, %vm93
    %v95 = vsel %vm94, %v86, %v91
    %v96 = vrsqrt.pop %v85
    %v97 = vmul.f32 %v96, %v85
    %v98 = vmul.f32 %v97, %v96
    %v99 = vmul.f32 0.5, %v98
    %v100 = vsub.f32 1.5, %v99
    %v101 = vmul.f32 %v96, %v100
    %vm102 = vweird.f32 %v85
    %vm103 = vweird.f32 %v96
    %vm104 = vmor %vm102, %vm103
    %v105 = vsel %vm104, %v96, %v101
    %v106 = vmul.f32 %v72, %v95
    %v107 = vmul.f32 %v73, %v105
    %v108 = vld [vmem:[%s2] sm:$0x1]
    %v110 = vperm.slane %v108, 0
    %v112 = vmul.f32 %v106, %v110
    %v113 = vmul.f32 %v107, %v110
    %v114 = vld [vmem:[%s3] sm:$0x1]
    %v116 = vperm.slane %v114, 0
    %v118 = vadd.f32 %v112, %v116
    %v119 = vadd.f32 %v113, %v116
    %120 = vst.msk [vmem:[#allocation7] sm:$0xff] %vm56, %v118
    %121 = vst.msk [vmem:[#allocation7 + $0x8] sm:$0xff] %vm56, %v119
    // Predicated region
    $region26: #{tpu_custom_call.1} parent=1 // pred_check
      _
    $region27: #{tpu_custom_call.1} parent=1 // pred_check_branch
      %123 = sbr.rel (0) target = $region29
    $region28: #{tpu_custom_call.1} parent=1 // pred_region
      %125 = vsyncadd [#allocation4], 0
      %s126 = sshll.u32 [#allocation7], 4
      %s127 = int_to_ptr.vmem [resolvable:$true] %s126
      %s128 = sshll.u32 %s4, 4
      %s129 = int_to_ptr.hbm [resolvable:$true] %s128
      %134 = dma.vmem_to_hbm [thread:$0]  %s127, 256, %s129, [#allocation4], 128, 128, 8
    $region29: #{tpu_custom_call.1} parent=1 // pred_fallthru
      _
    // Predicated region
    $region30: #{tpu_custom_call.1} parent=1 // pred_check
      _
    $region31: #{tpu_custom_call.1} parent=1 // pred_check_branch
      %136 = sbr.rel (0) target = $region33
    $region32: #{tpu_custom_call.1} parent=1 // pred_region
      %138 = dma.done [#allocation4], 256
    $region33: #{tpu_custom_call.1} parent=1 // pred_fallthru
      _
    %139 = vsyncpa [#allocation3], 1
    %140 = vsyncpa [#allocation6], 1
    %141 = vsyncpa [#allocation4], 1

</llo_original>
